<compile_context>
chip_gen: v7x
topology: tpu7x:2x2x1
jax: 0.10.0
libtpu: 0.0.40
codegen_flags: <defaults>
</compile_context>

<pallas_src>
import functools
import re

import jax
import jax.numpy as jnp
from jax.experimental import pallas as pl
from jax.experimental.pallas import tpu as pltpu


def _round_up(x, m):
    return ((x + m - 1) // m) * m


def _tpu_generation():
    """Best-effort TPU generation (5, 6, 7, ...) from device_kind; 0 if unknown."""
    try:
        dev = jax.devices()[0]
        if dev.platform != "tpu":
            return 0
        m = re.search(r"(\d+)", dev.device_kind)
        return int(m.group(1)) if m else 0
    except Exception:
        return 0


def _vmem_limit_bytes(gen):
    # v5e/v6e: 128 MiB physical VMEM (scoped default 16/32 MiB -> raise it).
    # v7x: only 64 MiB physical -> stay conservative; unknown -> conservative.
    if gen in (5, 6):
        return 110 << 20
    return 48 << 20


def _choose_tile_b(B, ob_dim, Hp, ac_dim, gen):
    """Largest batch tile that fits the per-generation VMEM budget."""
    vmem_budget = (96 << 20) if gen in (5, 6) else (40 << 20)
    # resident weights (bf16) + f32 biases, single-buffered
    weight_bytes = (ob_dim * Hp + Hp * Hp + Hp * ac_dim) * 2 + (2 * Hp + ac_dim) * 4
    # per-row cost: double-buffered f32 obs in + f32 mean out tiles, plus ~2 live
    # f32 (tile_b, Hp) activation slabs and one bf16 copy inside the body.
    per_row = 2 * ob_dim * 4 + 2 * ac_dim * 4 + 2 * Hp * 4 + Hp * 2
    cap = max((vmem_budget - weight_bytes) // per_row, 16)
    cap = min(cap, 8192)
    if gen >= 7 and B >= 32:
        # keep >= 2 grid steps so the "parallel" batch axis megacore-shards
        # across both TensorCores on v7x.
        cap = min(cap, _round_up(pl.cdiv(B, 2), 16))
    # sublane alignment: 256 rows when big, otherwise 16 (bf16 packs 16 sublanes)
    cap = (cap // 256) * 256 if cap >= 512 else (cap // 16) * 16
    cap = max(cap, 16)
    if B <= cap:
        return B          # single block spanning the whole batch (full-dim block is legal)
    return cap            # ragged last block handled by the cdiv grid + masking


def mlp_policy_kernel(obs_ref, w1_ref, b1_ref, w2_ref, b2_ref, w3_ref, b3_ref,
                      mean_ref, *, acts_dtype, tanh_dtype):
    # obs arrives f32 straight from HBM; cast to the compute dtype on-chip.
    x = obs_ref[...].astype(acts_dtype)                               # (TB, ob_dim)

    # hidden layer 1: Linear (f32 accumulate on MXU) + Tanh (EUP)
    h = jnp.dot(x, w1_ref[...], preferred_element_type=jnp.float32) + b1_ref[...]
    h = jnp.tanh(h.astype(tanh_dtype)).astype(acts_dtype)

    # hidden layer 2: Linear + Tanh
    h = jnp.dot(h, w2_ref[...], preferred_element_type=jnp.float32) + b2_ref[...]
    h = jnp.tanh(h.astype(tanh_dtype)).astype(acts_dtype)

    # output layer: Linear (identity output activation)
    mean = jnp.dot(h, w3_ref[...], preferred_element_type=jnp.float32) + b3_ref[...]
    mean_ref[...] = mean.astype(mean_ref.dtype)


def prepare_params(params, *, compute_dtype=jnp.bfloat16):
    """One-time parameter preparation (hoisted out of the per-call hot path):
    pad the hidden dim to a lane-dense multiple of 128, cast weights to the
    compute dtype, reshape biases to (1, N) f32, and precompute std=exp(logstd)."""
    w1, b1, w2, b2, w3, b3, logstd = params
    hidden = w1.shape[1]
    ac_dim = w3.shape[1]

    Hp = max(_round_up(hidden, 128), 128)
    if Hp != hidden:
        ph = Hp - hidden
        w1 = jnp.pad(w1, ((0, 0), (0, ph)))
        b1 = jnp.pad(b1, ((0, ph),))          # zeros -> tanh(0)=0, inert
        w2 = jnp.pad(w2, ((0, ph), (0, ph)))
        b2 = jnp.pad(b2, ((0, ph),))
        w3 = jnp.pad(w3, ((0, ph), (0, 0)))

    return dict(
        w1=w1.astype(compute_dtype),
        b1=b1.reshape(1, Hp).astype(jnp.float32),
        w2=w2.astype(compute_dtype),
        b2=b2.reshape(1, Hp).astype(jnp.float32),
        w3=w3.astype(compute_dtype),
        b3=b3.reshape(1, ac_dim).astype(jnp.float32),
        std=jnp.exp(logstd),
    )


def mlp_policy_forward(obs, prepared, *, tile_b=None, tanh_dtype=None):
    """Runs the MLPPolicy forward pass. Returns (mean, std) of Normal(mean, std)."""
    w1, b1, w2, b2, w3, b3, std = (prepared[k] for k in
                                   ("w1", "b1", "w2", "b2", "w3", "b3", "std"))
    B, ob_dim = obs.shape
    Hp = w1.shape[1]
    ac_dim = w3.shape[1]
    acts_dtype = w1.dtype

    gen = _tpu_generation()
    if tanh_dtype is None:
        # bf16 EUP exists on v6e/v7x; v5e (and unknown) keep f32 tanh.
        tanh_dtype = jnp.bfloat16 if gen >= 6 else jnp.float32
    if tile_b is None:
        tile_b = _choose_tile_b(B, ob_dim, Hp, ac_dim, gen)

    grid = (pl.cdiv(B, tile_b),)

    w_item = jnp.dtype(acts_dtype).itemsize
    cost = pl.CostEstimate(
        flops=2 * B * (ob_dim * Hp + Hp * Hp + Hp * ac_dim),
        transcendentals=2 * B * Hp,
        bytes_accessed=(B * ob_dim * 4                                 # obs read (f32)
                        + (ob_dim * Hp + Hp * Hp + Hp * ac_dim) * w_item  # weights
                        + (2 * Hp + ac_dim) * 4                        # biases
                        + B * ac_dim * 4),                             # mean write
    )

    # Weights/biases have a constant (0,0) index_map -> fetched once; a single
    # buffer is enough (halves resident-weight VMEM vs. the default 2 buffers).
    resident = dict(pipeline_mode=pl.Buffered(1))

    kernel = functools.partial(mlp_policy_kernel,
                               acts_dtype=acts_dtype, tanh_dtype=tanh_dtype)

    mean = pl.pallas_call(
        kernel,
        out_shape=jax.ShapeDtypeStruct((B, ac_dim), jnp.float32),
        grid_spec=pltpu.PrefetchScalarGridSpec(
            num_scalar_prefetch=0,
            grid=grid,
            in_specs=[
                pl.BlockSpec((tile_b, ob_dim), lambda i: (i, 0)),            # obs tile
                pl.BlockSpec((ob_dim, Hp), lambda i: (0, 0), **resident),    # W1
                pl.BlockSpec((1, Hp), lambda i: (0, 0), **resident),         # b1
                pl.BlockSpec((Hp, Hp), lambda i: (0, 0), **resident),        # W2
                pl.BlockSpec((1, Hp), lambda i: (0, 0), **resident),         # b2
                pl.BlockSpec((Hp, ac_dim), lambda i: (0, 0), **resident),    # W3
                pl.BlockSpec((1, ac_dim), lambda i: (0, 0), **resident),     # b3
            ],
            out_specs=pl.BlockSpec((tile_b, ac_dim), lambda i: (i, 0)),      # mean
        ),
        compiler_params=pltpu.CompilerParams(
            dimension_semantics=("parallel",),
            vmem_limit_bytes=_vmem_limit_bytes(gen),
        ),
        cost_estimate=cost,
    )(obs, w1, b1, w2, b2, w3, b3)

    return mean, std


def init_params(key, ob_dim, ac_dim, n_layers, layer_size):
    """Deterministic init matching PyTorch nn.Linear default (U(-1/sqrt(in), 1/sqrt(in)))."""
    # TODO(synk): generalize the fused kernel to arbitrary n_layers via an
    # in-kernel fori_loop over stacked (L, Hp, Hp) weights (activations stay in VMEM).
    assert n_layers == 2
    keys = jax.random.split(key, 6)

    def linear(kw, kb, fan_in, fan_out):
        bound = 1.0 / jnp.sqrt(fan_in)
        w = jax.random.uniform(kw, (fan_in, fan_out), jnp.float32, -bound, bound)
        b = jax.random.uniform(kb, (fan_out,), jnp.float32, -bound, bound)
        return w, b

    w1, b1 = linear(keys[0], keys[1], ob_dim, layer_size)
    w2, b2 = linear(keys[2], keys[3], layer_size, layer_size)
    w3, b3 = linear(keys[4], keys[5], layer_size, ac_dim)
    logstd = jnp.zeros((ac_dim,), jnp.float32)   # nn.Parameter(torch.zeros(ac_dim))
    return (w1, b1, w2, b2, w3, b3, logstd)


def reference_forward_f32(obs, params):
    w1, b1, w2, b2, w3, b3, logstd = params
    h = jnp.tanh(obs @ w1 + b1)
    h = jnp.tanh(h @ w2 + b2)
    mean = h @ w3 + b3
    return mean, jnp.exp(logstd)


def reference_forward_mixed(obs, params, tanh_dtype, compute_dtype=jnp.bfloat16):
    """Same op sequence as the kernel (bf16 inputs, f32 accumulate, tanh in tanh_dtype)."""
    w1, b1, w2, b2, w3, b3, logstd = params
    x = obs.astype(compute_dtype)
    h = jnp.dot(x, w1.astype(compute_dtype), preferred_element_type=jnp.float32) + b1
    h = jnp.tanh(h.astype(tanh_dtype)).astype(compute_dtype)
    h = jnp.dot(h, w2.astype(compute_dtype), preferred_element_type=jnp.float32) + b2
    h = jnp.tanh(h.astype(tanh_dtype)).astype(compute_dtype)
    mean = jnp.dot(h, w3.astype(compute_dtype), preferred_element_type=jnp.float32) + b3
    return mean, jnp.exp(logstd)


if __name__ == "__main__":
    key = jax.random.PRNGKey(0)
    k_obs, k_params = jax.random.split(key)

    batch, ob_dim, ac_dim, n_layers, layer_size = 8, 16, 4, 2, 32

    obs = jax.random.normal(k_obs, (batch, ob_dim), jnp.float32)
    params = init_params(k_params, ob_dim, ac_dim, n_layers, layer_size)

    prepared = prepare_params(params)            # one-time: pad + cast + exp(logstd)
    mean, std = mlp_policy_forward(obs, prepared)
    jax.block_until_ready((mean, std))

    gen = _tpu_generation()
    tanh_dtype = jnp.bfloat16 if gen >= 6 else jnp.float32

    mean_mx, std_mx = reference_forward_mixed(obs, params, tanh_dtype)
    mean_f32, std_f32 = reference_forward_f32(obs, params)

    assert mean.shape == (batch, ac_dim) and std.shape == (ac_dim,)
    assert bool(jnp.all(jnp.isfinite(mean)))
    assert jnp.allclose(mean, mean_mx, atol=2e-2, rtol=2e-2), "mean vs mixed-precision ref"
    assert jnp.allclose(mean, mean_f32, atol=5e-2, rtol=5e-2), "mean vs f32 ref"
    assert jnp.allclose(std, std_f32, atol=1e-6, rtol=1e-6), "std mismatch"

    print("KERNEL_OK")
</pallas_src>

<mosaic_0001>
module attributes {stable_mosaic.version = 11 : i64} {
  func.func @mlp_policy_kernel(%arg0: i32, %arg1: memref<8x16xf32, #tpu.memory_space<vmem>>, %arg2: memref<16x128xbf16, #tpu.memory_space<vmem>>, %arg3: memref<1x128xf32, #tpu.memory_space<vmem>>, %arg4: memref<128x128xbf16, #tpu.memory_space<vmem>>, %arg5: memref<1x128xf32, #tpu.memory_space<vmem>>, %arg6: memref<128x4xbf16, #tpu.memory_space<vmem>>, %arg7: memref<1x4xf32, #tpu.memory_space<vmem>>, %arg8: memref<8x4xf32, #tpu.memory_space<vmem>>) attributes {dimension_semantics = [#tpu.dimension_semantics<parallel>], iteration_bounds = array<i64: 1>, scalar_prefetch = 0 : i64, scratch_operands = 0 : i64, tpu.core_type = #tpu.core_type<tc>, window_params = [{transform_indices = @transform_0, window_bounds = array<i64: 8, 16>}, {pipeline_mode = #tpu.pipeline_mode<synchronous>, transform_indices = @transform_1, window_bounds = array<i64: 16, 128>}, {pipeline_mode = #tpu.pipeline_mode<synchronous>, transform_indices = @transform_2, window_bounds = array<i64: 1, 128>}, {pipeline_mode = #tpu.pipeline_mode<synchronous>, transform_indices = @transform_3, window_bounds = array<i64: 128, 128>}, {pipeline_mode = #tpu.pipeline_mode<synchronous>, transform_indices = @transform_4, window_bounds = array<i64: 1, 128>}, {pipeline_mode = #tpu.pipeline_mode<synchronous>, transform_indices = @transform_5, window_bounds = array<i64: 128, 4>}, {pipeline_mode = #tpu.pipeline_mode<synchronous>, transform_indices = @transform_6, window_bounds = array<i64: 1, 4>}, {transform_indices = @transform_7, window_bounds = array<i64: 8, 4>}]} {
    %c0 = arith.constant 0 : index
    %c0_0 = arith.constant 0 : index
    %0 = vector.load %arg1[%c0, %c0_0] : memref<8x16xf32, #tpu.memory_space<vmem>>, vector<8x16xf32>
    %1 = arith.truncf %0 : vector<8x16xf32> to vector<8x16xbf16>
    %c0_1 = arith.constant 0 : index
    %c0_2 = arith.constant 0 : index
    %2 = vector.load %arg2[%c0_1, %c0_2] : memref<16x128xbf16, #tpu.memory_space<vmem>>, vector<16x128xbf16>
    %cst = arith.constant dense<0.000000e+00> : vector<8x128xf32>
    %3 = tpu.matmul %1, %2, %cst {dimension_numbers = #tpu.dot_dimension_numbers<[1], [0], [0], [1], [0, 0, 1, 1], [], []>} : vector<8x16xbf16>, vector<16x128xbf16>, vector<8x128xf32> -> vector<8x128xf32>
    %c0_3 = arith.constant 0 : index
    %c0_4 = arith.constant 0 : index
    %4 = vector.load %arg3[%c0_3, %c0_4] : memref<1x128xf32, #tpu.memory_space<vmem>>, vector<1x128xf32>
    %5 = vector.broadcast %4 : vector<1x128xf32> to vector<8x128xf32>
    %6 = arith.addf %3, %5 : vector<8x128xf32>
    %7 = math.tanh %6 : vector<8x128xf32>
    %8 = arith.truncf %7 : vector<8x128xf32> to vector<8x128xbf16>
    %c0_5 = arith.constant 0 : index
    %c0_6 = arith.constant 0 : index
    %9 = vector.load %arg4[%c0_5, %c0_6] : memref<128x128xbf16, #tpu.memory_space<vmem>>, vector<128x128xbf16>
    %cst_7 = arith.constant dense<0.000000e+00> : vector<8x128xf32>
    %10 = tpu.matmul %8, %9, %cst_7 {dimension_numbers = #tpu.dot_dimension_numbers<[1], [0], [0], [1], [0, 0, 1, 1], [], []>} : vector<8x128xbf16>, vector<128x128xbf16>, vector<8x128xf32> -> vector<8x128xf32>
    %c0_8 = arith.constant 0 : index
    %c0_9 = arith.constant 0 : index
    %11 = vector.load %arg5[%c0_8, %c0_9] : memref<1x128xf32, #tpu.memory_space<vmem>>, vector<1x128xf32>
    %12 = vector.broadcast %11 : vector<1x128xf32> to vector<8x128xf32>
    %13 = arith.addf %10, %12 : vector<8x128xf32>
    %14 = math.tanh %13 : vector<8x128xf32>
    %15 = arith.truncf %14 : vector<8x128xf32> to vector<8x128xbf16>
    %c0_10 = arith.constant 0 : index
    %c0_11 = arith.constant 0 : index
    %16 = vector.load %arg6[%c0_10, %c0_11] : memref<128x4xbf16, #tpu.memory_space<vmem>>, vector<128x4xbf16>
    %cst_12 = arith.constant dense<0.000000e+00> : vector<8x4xf32>
    %17 = tpu.matmul %15, %16, %cst_12 {dimension_numbers = #tpu.dot_dimension_numbers<[1], [0], [0], [1], [0, 0, 1, 1], [], []>} : vector<8x128xbf16>, vector<128x4xbf16>, vector<8x4xf32> -> vector<8x4xf32>
    %c0_13 = arith.constant 0 : index
    %c0_14 = arith.constant 0 : index
    %18 = vector.load %arg7[%c0_13, %c0_14] : memref<1x4xf32, #tpu.memory_space<vmem>>, vector<1x4xf32>
    %19 = vector.broadcast %18 : vector<1x4xf32> to vector<8x4xf32>
    %20 = arith.addf %17, %19 : vector<8x4xf32>
    %c0_15 = arith.constant 0 : index
    %c0_16 = arith.constant 0 : index
    %21 = vector.load %arg8[%c0_15, %c0_16] : memref<8x4xf32, #tpu.memory_space<vmem>>, vector<8x4xf32>
    tpu.vector_store %arg8[%c0_15, %c0_16], %20 {strides = array<i32>} : memref<8x4xf32, #tpu.memory_space<vmem>>, vector<8x4xf32>,
    return
  }
  func.func @transform_0(%arg0: i32) -> (i32, i32) {
    %c0_i32 = arith.constant 0 : i32
    %c0_i32_0 = arith.constant 0 : i32
    return %arg0, %c0_i32 : i32, i32
  }
  func.func @transform_1(%arg0: i32) -> (i32, i32) {
    %c0_i32 = arith.constant 0 : i32
    %c0_i32_0 = arith.constant 0 : i32
    %c0_i32_1 = arith.constant 0 : i32
    return %c0_i32, %c0_i32_0 : i32, i32
  }
  func.func @transform_2(%arg0: i32) -> (i32, i32) {
    %c0_i32 = arith.constant 0 : i32
    %c0_i32_0 = arith.constant 0 : i32
    %c0_i32_1 = arith.constant 0 : i32
    return %c0_i32, %c0_i32_0 : i32, i32
  }
  func.func @transform_3(%arg0: i32) -> (i32, i32) {
    %c0_i32 = arith.constant 0 : i32
    %c0_i32_0 = arith.constant 0 : i32
    %c0_i32_1 = arith.constant 0 : i32
    return %c0_i32, %c0_i32_0 : i32, i32
  }
  func.func @transform_4(%arg0: i32) -> (i32, i32) {
    %c0_i32 = arith.constant 0 : i32
    %c0_i32_0 = arith.constant 0 : i32
    %c0_i32_1 = arith.constant 0 : i32
    return %c0_i32, %c0_i32_0 : i32, i32
  }
  func.func @transform_5(%arg0: i32) -> (i32, i32) {
    %c0_i32 = arith.constant 0 : i32
    %c0_i32_0 = arith.constant 0 : i32
    %c0_i32_1 = arith.constant 0 : i32
    return %c0_i32, %c0_i32_0 : i32, i32
  }
  func.func @transform_6(%arg0: i32) -> (i32, i32) {
    %c0_i32 = arith.constant 0 : i32
    %c0_i32_0 = arith.constant 0 : i32
    %c0_i32_1 = arith.constant 0 : i32
    return %c0_i32, %c0_i32_0 : i32, i32
  }
  func.func @transform_7(%arg0: i32) -> (i32, i32) {
    %c0_i32 = arith.constant 0 : i32
    %c0_i32_0 = arith.constant 0 : i32
    return %arg0, %c0_i32 : i32, i32
  }
}

</mosaic_0001>

<llo_original>
// kernel: tpu_custom_call.1
$region0: #{tpu_custom_call.1}
  #allocation0 [shape = 'u32[]', space=smem, size = 0x4, offset = 0x4, fixed_abs, tag = 'smem constant byte address 0x4 - core index']
  #allocation1 [shape = 'u32[144,128]{1,0:T(1,128)}', space=vmem, size = 0x12000, scoped, tag = 'internal scratch']
  %s0 = inlined_call_operand.vmem [shape: f32[8,16], index: 0, kind: input, shape index: {}]
  %s1 = inlined_call_operand.hbm [shape: bf16[16,128], index: 1, kind: input, shape index: {}]
  %s2 = inlined_call_operand.vmem [shape: f32[1,128], index: 2, kind: input, shape index: {}]
  %s3 = inlined_call_operand.vmem [shape: bf16[128,128], index: 3, kind: input, shape index: {}]
  %s4 = inlined_call_operand.vmem [shape: f32[1,128], index: 4, kind: input, shape index: {}]
  %s5 = inlined_call_operand.vmem [shape: bf16[128,4], index: 5, kind: input, shape index: {}]
  %s6 = inlined_call_operand.vmem [shape: f32[1,4], index: 6, kind: input, shape index: {}]
  %s7 = inlined_call_operand.vmem [shape: f32[8,4], index: 7, kind: output, shape index: {}]
  %s8 = sld [smem:[#allocation0]]
  $region42: #{tpu_custom_call.1} parent=0
    _
  %s10 = ssub.s32 1, %s8
  %s11 = scalar_select 0, %s10, %s8
  $region1: #{tpu_custom_call.1} parent=0
    #allocation2 [shape = 'u8[4096]{0}', space=vmem, size = 0x1000, scoped, tag = 'input window, operand 1, single buffered']
    #allocation3 [shape = 's32[1]{0}', space=sflag, size = 0x4, scoped, tag = 'scoped memory for tpu_custom_call.1']
    %12 = vsyncpa [#allocation3], 0
    // Predicated region
    $region2: #{tpu_custom_call.1} parent=1 // pred_check
      _
    $region3: #{tpu_custom_call.1} parent=1 // pred_check_branch
      %14 = sbr.rel (0) target = $region5
    $region4: #{tpu_custom_call.1} parent=1 // pred_region
      _
    $region5: #{tpu_custom_call.1} parent=1 // pred_fallthru
      _
    // Predicated region
    $region6: #{tpu_custom_call.1} parent=1 // pred_check
      _
    $region7: #{tpu_custom_call.1} parent=1 // pred_check_branch
      %16 = sbr.rel (0) target = $region9
    $region8: #{tpu_custom_call.1} parent=1 // pred_region
      %s18 = ssub.s32 128, 128
      %19 = vsyncadd [#allocation3], %s18
      %s20 = sshll.u32 [#allocation2], 4
      %s21 = int_to_ptr.vmem [resolvable:$true] %s20
      %26 = dma.hbm_to_vmem [thread:$0]  %s1, 128, %s21, [#allocation3], 64, 64, 4
    $region9: #{tpu_custom_call.1} parent=1 // pred_fallthru
      _
    // Predicated region
    $region10: #{tpu_custom_call.1} parent=1 // pred_check
      _
    $region11: #{tpu_custom_call.1} parent=1 // pred_check_branch
      %28 = sbr.rel (0) target = $region13
    $region12: #{tpu_custom_call.1} parent=1 // pred_region
      _
    $region13: #{tpu_custom_call.1} parent=1 // pred_fallthru
      _
    // Predicated region
    $region14: #{tpu_custom_call.1} parent=1 // pred_check
      _
    $region15: #{tpu_custom_call.1} parent=1 // pred_check_branch
      %30 = sbr.rel (0) target = $region17
    $region16: #{tpu_custom_call.1} parent=1 // pred_region
      _
    $region17: #{tpu_custom_call.1} parent=1 // pred_fallthru
      _
    // Predicated region
    $region18: #{tpu_custom_call.1} parent=1 // pred_check
      _
    $region19: #{tpu_custom_call.1} parent=1 // pred_check_branch
      %32 = sbr.rel (0) target = $region21
    $region20: #{tpu_custom_call.1} parent=1 // pred_region
      _
    $region21: #{tpu_custom_call.1} parent=1 // pred_fallthru
      _
    // Predicated region
    $region22: #{tpu_custom_call.1} parent=1 // pred_check
      _
    $region23: #{tpu_custom_call.1} parent=1 // pred_check_branch
      %34 = sbr.rel (0) target = $region25
    $region24: #{tpu_custom_call.1} parent=1 // pred_region
      _
    $region25: #{tpu_custom_call.1} parent=1 // pred_fallthru
      _
    // Predicated region
    $region26: #{tpu_custom_call.1} parent=1 // pred_check
      _
    $region27: #{tpu_custom_call.1} parent=1 // pred_check_branch
      %36 = sbr.rel (0) target = $region29
    $region28: #{tpu_custom_call.1} parent=1 // pred_region
      _
    $region29: #{tpu_custom_call.1} parent=1 // pred_fallthru
      _
    // Predicated region
    $region30: #{tpu_custom_call.1} parent=1 // pred_check
      _
    $region31: #{tpu_custom_call.1} parent=1 // pred_check_branch
      %38 = sbr.rel (0) target = $region33
    $region32: #{tpu_custom_call.1} parent=1 // pred_region
      %39 = dma.done [#allocation3], 128
    $region33: #{tpu_custom_call.1} parent=1 // pred_fallthru
      _
    %v41 = vld [vmem:[%s0] sm:$0xff]
    %v42 = vpack.c.bf16 %v41, %v41
    %v43 = vld [vmem:[#allocation2] sm:$0xf]
    %v44 = vld [vmem:[#allocation2 + $0x4] sm:$0xf]
    %v45 = vld [vmem:[%s2] sm:$0x1]
    %v47 = vlaneseq
    %v48 = vshrl.u32 %v47, 7
    %v49 = vsub.s32 0, %v48
    %v50 = vrot.slane %v45, %v49
    %v54 = vunpack.c.l.b16 %v43
    %v55 = vunpack.c.l.b16 %v44
    %v56 = vpack.c.b16 %v55, %v54
    %vm58 = vcmask 130048
    %v60 = vsel %vm58, %v42, 0
    %62 = vmatprep.subr.bf16.mxu0 0
    %63 = vmatpush1.bf16.msra.mxu0 %v56
    %64 = vmatprep.subr.bf16.mxu0 0
    %65 = vmatpush1.bf16.msra.mxu0 0
    %66 = vmatprep.subr.bf16.mxu0 0
    %67 = vmatpush1.bf16.msra.mxu0 0
    %68 = vmatprep.subr.bf16.mxu0 0
    %69 = vmatpush1.bf16.msra.mxu0 0
    %70 = vmatprep.subr.bf16.mxu0 0
    %71 = vmatpush1.bf16.msra.mxu0 0
    %72 = vmatprep.subr.bf16.mxu0 0
    %73 = vmatpush1.bf16.msra.mxu0 0
    %74 = vmatprep.subr.bf16.mxu0 0
    %75 = vmatpush1.bf16.msra.mxu0 0
    %76 = vmatprep.subr.bf16.mxu0 0
    %77 = vmatpush1.bf16.msra.mxu0 0
    %78 = vmatprep.subr.bf16.mxu0 0
    %79 = vmatpush1.bf16.msra.mxu0 0
    %80 = vmatprep.subr.bf16.mxu0 0
    %81 = vmatpush1.bf16.msra.mxu0 0
    %82 = vmatprep.subr.bf16.mxu0 0
    %83 = vmatpush1.bf16.msra.mxu0 0
    %84 = vmatprep.subr.bf16.mxu0 0
    %85 = vmatpush1.bf16.msra.mxu0 0
    %86 = vmatprep.subr.bf16.mxu0 0
    %87 = vmatpush1.bf16.msra.mxu0 0
    %88 = vmatprep.subr.bf16.mxu0 0
    %89 = vmatpush1.bf16.msra.mxu0 0
    %90 = vmatprep.subr.bf16.mxu0 0
    %91 = vmatpush1.bf16.msra.mxu0 0
    %92 = vmatprep.subr.bf16.mxu0 0
    %93 = vmatpush1.bf16.msra.mxu0 0
    %94 = vmatprep.mubr.bf16.mxu0 0
    %95 = vmatmul.mubr.bf16.gmra.mrb[0].mxu0 %v60
    %v96 = vpop.f32.mrb[0].mxu0
    %v97 = vadd.f32 %v50, %v96
    %v98 = vpop.f32.mrb[0].mxu0
    %v99 = vpop.f32.mrb[0].mxu0
    %v100 = vpop.f32.mrb[0].mxu0
    %101 = vdwg.mxu0
    %v102 = vtanh.pop %v97
    %v103 = vpack.c.bf16 %v102, %v102
    %v104 = vld [vmem:[%s3] sm:$0xf]
    %v105 = vld [vmem:[%s3 + $0x4] sm:$0xf]
    %v106 = vld [vmem:[%s3 + $0x8] sm:$0xf]
    %v107 = vld [vmem:[%s3 + $0xc] sm:$0xf]
    %v108 = vld [vmem:[%s3 + $0x10] sm:$0xf]
    %v109 = vld [vmem:[%s3 + $0x14] sm:$0xf]
    %v110 = vld [vmem:[%s3 + $0x18] sm:$0xf]
    %v111 = vld [vmem:[%s3 + $0x1c] sm:$0xf]
    %v112 = vld [vmem:[%s3 + $0x20] sm:$0xf]
    %v113 = vld [vmem:[%s3 + $0x24] sm:$0xf]
    %v114 = vld [vmem:[%s3 + $0x28] sm:$0xf]
    %v115 = vld [vmem:[%s3 + $0x2c] sm:$0xf]
    %v116 = vld [vmem:[%s3 + $0x30] sm:$0xf]
    %v117 = vld [vmem:[%s3 + $0x34] sm:$0xf]
    %v118 = vld [vmem:[%s3 + $0x38] sm:$0xf]
    %v119 = vld [vmem:[%s3 + $0x3c] sm:$0xf]
    %v120 = vld [vmem:[%s4] sm:$0x1]
    %v122 = vlaneseq
    %v123 = vshrl.u32 %v122, 7
    %v124 = vsub.s32 0, %v123
    %v125 = vrot.slane %v120, %v124
    %v143 = vunpack.c.l.b16 %v104
    %v144 = vunpack.c.l.b16 %v105
    %v145 = vunpack.c.l.b16 %v106
    %v146 = vunpack.c.l.b16 %v107
    %v147 = vunpack.c.l.b16 %v108
    %v148 = vunpack.c.l.b16 %v109
    %v149 = vunpack.c.l.b16 %v110
    %v150 = vunpack.c.l.b16 %v111
    %v151 = vunpack.c.l.b16 %v112
    %v152 = vunpack.c.l.b16 %v113
    %v153 = vunpack.c.l.b16 %v114
    %v154 = vunpack.c.l.b16 %v115
    %v155 = vunpack.c.l.b16 %v116
    %v156 = vunpack.c.l.b16 %v117
    %v157 = vunpack.c.l.b16 %v118
    %v158 = vunpack.c.l.b16 %v119
    %v159 = vpack.c.b16 %v144, %v143
    %v160 = vpack.c.b16 %v146, %v145
    %v161 = vpack.c.b16 %v148, %v147
    %v162 = vpack.c.b16 %v150, %v149
    %v163 = vpack.c.b16 %v152, %v151
    %v164 = vpack.c.b16 %v154, %v153
    %v165 = vpack.c.b16 %v156, %v155
    %v166 = vpack.c.b16 %v158, %v157
    %175 = vmatprep.subr.bf16.mxu0 0
    %176 = vmatpush1.bf16.msra.mxu0 %v159
    %177 = vmatprep.subr.bf16.mxu0 0
    %178 = vmatpush1.bf16.msra.mxu0 %v160
    %179 = vmatprep.subr.bf16.mxu0 0
    %180 = vmatpush1.bf16.msra.mxu0 %v161
    %181 = vmatprep.subr.bf16.mxu0 0
    %182 = vmatpush1.bf16.msra.mxu0 %v162
    %183 = vmatprep.subr.bf16.mxu0 0
    %184 = vmatpush1.bf16.msra.mxu0 %v163
    %185 = vmatprep.subr.bf16.mxu0 0
    %186 = vmatpush1.bf16.msra.mxu0 %v164
    %187 = vmatprep.subr.bf16.mxu0 0
    %188 = vmatpush1.bf16.msra.mxu0 %v165
    %189 = vmatprep.subr.bf16.mxu0 0
    %190 = vmatpush1.bf16.msra.mxu0 %v166
    %191 = vmatprep.subr.bf16.mxu0 0
    %192 = vmatpush1.bf16.msra.mxu0 0
    %193 = vmatprep.subr.bf16.mxu0 0
    %194 = vmatpush1.bf16.msra.mxu0 0
    %195 = vmatprep.subr.bf16.mxu0 0
    %196 = vmatpush1.bf16.msra.mxu0 0
    %197 = vmatprep.subr.bf16.mxu0 0
    %198 = vmatpush1.bf16.msra.mxu0 0
    %199 = vmatprep.subr.bf16.mxu0 0
    %200 = vmatpush1.bf16.msra.mxu0 0
    %201 = vmatprep.subr.bf16.mxu0 0
    %202 = vmatpush1.bf16.msra.mxu0 0
    %203 = vmatprep.subr.bf16.mxu0 0
    %204 = vmatpush1.bf16.msra.mxu0 0
    %205 = vmatprep.subr.bf16.mxu0 0
    %206 = vmatpush1.bf16.msra.mxu0 0
    %207 = vmatprep.mubr.bf16.mxu0 0
    %208 = vmatmul.mubr.bf16.gmra.mrb[0].mxu0 %v103
    %v209 = vpop.f32.mrb[0].mxu0
    %v210 = vadd.f32 %v125, %v209
    %v211 = vpop.f32.mrb[0].mxu0
    %v212 = vpop.f32.mrb[0].mxu0
    %v213 = vpop.f32.mrb[0].mxu0
    %214 = vdwg.mxu0
    %v215 = vtanh.pop %v210
    %v216 = vpack.c.bf16 %v215, %v215
    %v217 = vld [vmem:[%s5] sm:$0xf]
    %v218 = vld [vmem:[%s5 + $0x4] sm:$0xf]
    %v219 = vld [vmem:[%s5 + $0x8] sm:$0xf]
    %v220 = vld [vmem:[%s5 + $0xc] sm:$0xf]
    %v221 = vld [vmem:[%s5 + $0x10] sm:$0xf]
    %v222 = vld [vmem:[%s5 + $0x14] sm:$0xf]
    %v223 = vld [vmem:[%s5 + $0x18] sm:$0xf]
    %v224 = vld [vmem:[%s5 + $0x1c] sm:$0xf]
    %v225 = vld [vmem:[%s5 + $0x20] sm:$0xf]
    %v226 = vld [vmem:[%s5 + $0x24] sm:$0xf]
    %v227 = vld [vmem:[%s5 + $0x28] sm:$0xf]
    %v228 = vld [vmem:[%s5 + $0x2c] sm:$0xf]
    %v229 = vld [vmem:[%s5 + $0x30] sm:$0xf]
    %v230 = vld [vmem:[%s5 + $0x34] sm:$0xf]
    %v231 = vld [vmem:[%s5 + $0x38] sm:$0xf]
    %v232 = vld [vmem:[%s5 + $0x3c] sm:$0xf]
    %v233 = vld [vmem:[%s6] sm:$0x1]
    %v235 = vlaneseq
    %v236 = vshrl.u32 %v235, 7
    %v237 = vsub.s32 0, %v236
    %v238 = vrot.slane %v233, %v237
    %v256 = vunpack.c.l.b16 %v217
    %v257 = vunpack.c.l.b16 %v218
    %v258 = vunpack.c.l.b16 %v219
    %v259 = vunpack.c.l.b16 %v220
    %v260 = vunpack.c.l.b16 %v221
    %v261 = vunpack.c.l.b16 %v222
    %v262 = vunpack.c.l.b16 %v223
    %v263 = vunpack.c.l.b16 %v224
    %v264 = vunpack.c.l.b16 %v225
    %v265 = vunpack.c.l.b16 %v226
    %v266 = vunpack.c.l.b16 %v227
    %v267 = vunpack.c.l.b16 %v228
    %v268 = vunpack.c.l.b16 %v229
    %v269 = vunpack.c.l.b16 %v230
    %v270 = vunpack.c.l.b16 %v231
    %v271 = vunpack.c.l.b16 %v232
    %v272 = vpack.c.b16 %v257, %v256
    %v273 = vpack.c.b16 %v259, %v258
    %v274 = vpack.c.b16 %v261, %v260
    %v275 = vpack.c.b16 %v263, %v262
    %v276 = vpack.c.b16 %v265, %v264
    %v277 = vpack.c.b16 %v267, %v266
    %v278 = vpack.c.b16 %v269, %v268
    %v279 = vpack.c.b16 %v271, %v270
    %288 = vmatprep.subr.bf16.mxu0 0
    %289 = vmatpush1.bf16.msra.mxu0 %v272
    %290 = vmatprep.subr.bf16.mxu0 0
    %291 = vmatpush1.bf16.msra.mxu0 %v273
    %292 = vmatprep.subr.bf16.mxu0 0
    %293 = vmatpush1.bf16.msra.mxu0 %v274
    %294 = vmatprep.subr.bf16.mxu0 0
    %295 = vmatpush1.bf16.msra.mxu0 %v275
    %296 = vmatprep.subr.bf16.mxu0 0
    %297 = vmatpush1.bf16.msra.mxu0 %v276
    %298 = vmatprep.subr.bf16.mxu0 0
    %299 = vmatpush1.bf16.msra.mxu0 %v277
    %300 = vmatprep.subr.bf16.mxu0 0
    %301 = vmatpush1.bf16.msra.mxu0 %v278
    %302 = vmatprep.subr.bf16.mxu0 0
    %303 = vmatpush1.bf16.msra.mxu0 %v279
    %304 = vmatprep.subr.bf16.mxu0 0
    %305 = vmatpush1.bf16.msra.mxu0 0
    %306 = vmatprep.subr.bf16.mxu0 0
    %307 = vmatpush1.bf16.msra.mxu0 0
    %308 = vmatprep.subr.bf16.mxu0 0
    %309 = vmatpush1.bf16.msra.mxu0 0
    %310 = vmatprep.subr.bf16.mxu0 0
    %311 = vmatpush1.bf16.msra.mxu0 0
    %312 = vmatprep.subr.bf16.mxu0 0
    %313 = vmatpush1.bf16.msra.mxu0 0
    %314 = vmatprep.subr.bf16.mxu0 0
    %315 = vmatpush1.bf16.msra.mxu0 0
    %316 = vmatprep.subr.bf16.mxu0 0
    %317 = vmatpush1.bf16.msra.mxu0 0
    %318 = vmatprep.subr.bf16.mxu0 0
    %319 = vmatpush1.bf16.msra.mxu0 0
    %320 = vmatprep.mubr.bf16.mxu0 0
    %321 = vmatmul.mubr.bf16.gmra.mrb[0].mxu0 %v216
    %v322 = vpop.f32.mrb[0].mxu0
    %v323 = vadd.f32 %v238, %v322
    %v324 = vpop.f32.mrb[0].mxu0
    %v325 = vpop.f32.mrb[0].mxu0
    %v326 = vpop.f32.mrb[0].mxu0
    %327 = vdwg.mxu0
    %vm328 = vcmask 31744
    %329 = vst.msk [vmem:[%s7] sm:$0xff] %vm328, %v323
    // Predicated region
    $region34: #{tpu_custom_call.1} parent=1 // pred_check
      _
    $region35: #{tpu_custom_call.1} parent=1 // pred_check_branch
      %331 = sbr.rel (0) target = $region37
    $region36: #{tpu_custom_call.1} parent=1 // pred_region
      _
    $region37: #{tpu_custom_call.1} parent=1 // pred_fallthru
      _
    // Predicated region
    $region38: #{tpu_custom_call.1} parent=1 // pred_check
      _
    $region39: #{tpu_custom_call.1} parent=1 // pred_check_branch
      %333 = sbr.rel (0) target = $region41
    $region40: #{tpu_custom_call.1} parent=1 // pred_region
      _
    $region41: #{tpu_custom_call.1} parent=1 // pred_fallthru
      _
    %334 = vsyncpa [#allocation3], 1

</llo_original>
